<compile_context>
chip_gen: v5e
topology: v5e:2x2
jax: 0.10.0
libtpu: 0.0.40
codegen_flags: <defaults>
</compile_context>

<pallas_src>
import functools

import jax
import jax.numpy as jnp
from jax.experimental import pallas as pl
from jax.experimental.pallas import tpu as pltpu


# ---------------------------------------------------------------------------
# Kernels
# ---------------------------------------------------------------------------
def _categorical_kernel_logits_probs(x_ref, w_ref, b_ref, logits_ref, probs_ref):
    # Linear: z = x @ W^T + b  (W already transposed to (D, A)); f32 accumulate.
    z = jnp.dot(x_ref[...], w_ref[...], preferred_element_type=jnp.float32)
    z = z + b_ref[...]                              # (TB, A) + (1, A)

    # Categorical(logits=z): numerically-stable log-softmax / softmax.
    m = jnp.max(z, axis=-1, keepdims=True)
    e = jnp.exp(z - m)
    s = jnp.sum(e, axis=-1, keepdims=True)
    log_norm = jnp.log(s) + m

    logits_ref[...] = (z - log_norm).astype(logits_ref.dtype)
    # Exact reciprocal keeps rows summing to 1 (approx=True would be a free
    # EUP win but breaks exact normalization).
    probs_ref[...] = (e * pl.reciprocal(s)).astype(probs_ref.dtype)


def _categorical_kernel_logits_only(x_ref, w_ref, b_ref, logits_ref):
    z = jnp.dot(x_ref[...], w_ref[...], preferred_element_type=jnp.float32)
    z = z + b_ref[...]
    m = jnp.max(z, axis=-1, keepdims=True)
    e = jnp.exp(z - m)
    s = jnp.sum(e, axis=-1, keepdims=True)
    logits_ref[...] = (z - (jnp.log(s) + m)).astype(logits_ref.dtype)


# ---------------------------------------------------------------------------
# Tiling / wrapper
# ---------------------------------------------------------------------------
def _choose_batch_tile(B, D, A, itemsize=4, budget_bytes=24 << 20):
    """Largest batch tile (multiple of 8, <=1024) fitting a VMEM byte budget."""
    resident = (D * A + A) * 4                       # weight + bias, f32-resident
    per_row = 2 * (D * itemsize + 2 * A * 4)         # double-buffered x + 2 outs
    tb = (budget_bytes - resident) // max(per_row, 1)
    tb = max(8, min(1024, int(tb)))
    tb = (tb // 8) * 8
    if B <= tb:
        return B                                     # full-dim block always legal
    return tb


def categorical_forward(x, w_t, bias2d, *, emit_probs=True, matmul_dtype=None,
                        block_b=None):
    """Fused linear + Categorical normalization.

    Args:
      x:      (B, D) activations.
      w_t:    (D, A) weight, already transposed from PyTorch's (A, D).
      bias2d: (1, A) bias.
      emit_probs: if False, only normalized logits are written back (saves one
        full (B, A) HBM writeback); probs can be recovered as exp(logits).
      matmul_dtype: optional dtype (e.g. jnp.bfloat16) for the MXU inputs on
        v6e/v7x; accumulation and softmax math stay f32.
      block_b: override the batch tile size.

    Returns: logits (B, A) f32, and probs (B, A) f32 or None.
    """
    B, D = x.shape
    A = w_t.shape[1]

    if matmul_dtype is not None:
        x = x.astype(matmul_dtype)
        w_t = w_t.astype(matmul_dtype)

    itemsize = jnp.dtype(x.dtype).itemsize
    tb = block_b if block_b is not None else _choose_batch_tile(B, D, A, itemsize)
    grid = (pl.cdiv(B, tb),)

    # Explicit VMEM limit with 2x headroom, capped at v7x's 64 MiB physical.
    vmem_need = (D * A + A) * 4 + 2 * tb * (D * itemsize + 2 * A * 4)
    vmem_limit = int(min(64 << 20, max(2 * vmem_need, 16 << 20)))

    in_specs = [
        pl.BlockSpec((tb, D), lambda i: (i, 0)),     # x: streamed per batch tile
        pl.BlockSpec((D, A), lambda i: (0, 0)),      # weight: VMEM-resident
        pl.BlockSpec((1, A), lambda i: (0, 0)),      # bias:   VMEM-resident
    ]
    out_block = pl.BlockSpec((tb, A), lambda i: (i, 0))
    compiler_params = pltpu.CompilerParams(
        dimension_semantics=("parallel",),           # megacore-shard on v7x
        vmem_limit_bytes=vmem_limit,
    )

    if emit_probs:
        logits, probs = pl.pallas_call(
            _categorical_kernel_logits_probs,
            out_shape=(
                jax.ShapeDtypeStruct((B, A), jnp.float32),
                jax.ShapeDtypeStruct((B, A), jnp.float32),
            ),
            grid=grid,
            in_specs=in_specs,
            out_specs=(out_block, out_block),
            compiler_params=compiler_params,
        )(x, w_t, bias2d)
        return logits, probs

    logits = pl.pallas_call(
        _categorical_kernel_logits_only,
        out_shape=jax.ShapeDtypeStruct((B, A), jnp.float32),
        grid=grid,
        in_specs=in_specs,
        out_specs=out_block,
        compiler_params=compiler_params,
    )(x, w_t, bias2d)
    return logits, None

    # TODO(synk): very large D (tens of thousands) would want an extra
    # K-reduction grid axis with a VMEM accumulator; not needed for RL heads.


# ---------------------------------------------------------------------------
# Lightweight JAX mirrors of the PyTorch classes
# ---------------------------------------------------------------------------
class FixedCategoricalJax:
    """JAX mirror of FixedCategorical built from kernel outputs."""

    def __init__(self, logits, probs=None):
        self.logits = logits            # normalized: logsumexp(logits, -1) == 0
        self._probs = probs

    @property
    def probs(self):
        if self._probs is None:
            self._probs = jnp.exp(self.logits)
        return self._probs

    def mode(self):
        return jnp.argmax(self.probs, axis=-1, keepdims=True)

    def log_probs(self, actions):
        a = actions.squeeze(-1).astype(jnp.int32)
        return jnp.take_along_axis(self.logits, a[..., None], axis=-1)  # (B, 1)

    def sample(self, key):
        return jax.random.categorical(key, self.logits, axis=-1)[..., None]


class CategoricalJax:
    """JAX/Pallas mirror of the PyTorch `Categorical` module."""

    def __init__(self, weight, bias, *, emit_probs=True, matmul_dtype=None):
        # Transpose ONCE at parameter-setup time (hoisted out of the hot path).
        self.w_t = jnp.asarray(weight, jnp.float32).T            # (D, A)
        self.bias2d = jnp.asarray(bias, jnp.float32).reshape(1, -1)
        self.emit_probs = emit_probs
        self.matmul_dtype = matmul_dtype
        self._fwd = jax.jit(functools.partial(
            categorical_forward,
            emit_probs=emit_probs,
            matmul_dtype=matmul_dtype,
        ))

    def __call__(self, x):
        logits, probs = self._fwd(x, self.w_t, self.bias2d)
        return FixedCategoricalJax(logits, probs)


# ---------------------------------------------------------------------------
# Demo / correctness check
# ---------------------------------------------------------------------------
if __name__ == "__main__":
    # Shapes consistent with the module (a small RL policy head).
    num_inputs, num_outputs, batch = 32, 16, 8
    init_w = 0.5

    key = jax.random.PRNGKey(0)
    kx, kw, kb = jax.random.split(key, 3)

    x = jax.random.normal(kx, (batch, num_inputs), dtype=jnp.float32)
    weight = jax.random.uniform(
        kw, (num_outputs, num_inputs), minval=-init_w, maxval=init_w,
        dtype=jnp.float32)
    bias = jax.random.uniform(
        kb, (num_outputs,), minval=-init_w, maxval=init_w, dtype=jnp.float32)

    module = CategoricalJax(weight, bias, emit_probs=True)
    dist = module(x)
    jax.block_until_ready(dist.logits)
    jax.block_until_ready(dist.probs)

    # Also exercise the reduced-writeback path (probs recovered as exp(logits)).
    module_lo = CategoricalJax(weight, bias, emit_probs=False)
    dist_lo = module_lo(x)
    jax.block_until_ready(dist_lo.logits)

    # Plain-JAX reference.
    z_ref = x @ weight.T + bias
    logits_ref = z_ref - jax.nn.logsumexp(z_ref, axis=-1, keepdims=True)
    probs_ref = jax.nn.softmax(z_ref, axis=-1)

    assert jnp.allclose(dist.logits, logits_ref, atol=1e-5, rtol=1e-5)
    assert jnp.allclose(dist.probs, probs_ref, atol=1e-5, rtol=1e-5)
    assert jnp.allclose(dist_lo.logits, logits_ref, atol=1e-5, rtol=1e-5)
    assert jnp.allclose(dist_lo.probs, probs_ref, atol=1e-5, rtol=1e-5)
    assert dist.mode().shape == (batch, 1)
    assert dist.log_probs(dist.mode()).shape == (batch, 1)

    print("KERNEL_OK")
</pallas_src>

<mosaic_0001>
module attributes {stable_mosaic.version = 11 : i64} {
  func.func @_categorical_kernel_logits_probs(%arg0: i32, %arg1: memref<8x32xf32, #tpu.memory_space<vmem>>, %arg2: memref<32x16xf32, #tpu.memory_space<vmem>>, %arg3: memref<1x16xf32, #tpu.memory_space<vmem>>, %arg4: memref<8x16xf32, #tpu.memory_space<vmem>>, %arg5: memref<8x16xf32, #tpu.memory_space<vmem>>) attributes {dimension_semantics = [#tpu.dimension_semantics<parallel>], iteration_bounds = array<i64: 1>, scalar_prefetch = 0 : i64, scratch_operands = 0 : i64, tpu.core_type = #tpu.core_type<tc>, window_params = [{transform_indices = @transform_0, window_bounds = array<i64: 8, 32>}, {pipeline_mode = #tpu.pipeline_mode<synchronous>, transform_indices = @transform_1, window_bounds = array<i64: 32, 16>}, {pipeline_mode = #tpu.pipeline_mode<synchronous>, transform_indices = @transform_2, window_bounds = array<i64: 1, 16>}, {transform_indices = @transform_3, window_bounds = array<i64: 8, 16>}, {transform_indices = @transform_4, window_bounds = array<i64: 8, 16>}]} {
    %c0 = arith.constant 0 : index
    %c0_0 = arith.constant 0 : index
    %0 = vector.load %arg1[%c0, %c0_0] : memref<8x32xf32, #tpu.memory_space<vmem>>, vector<8x32xf32>
    %c0_1 = arith.constant 0 : index
    %c0_2 = arith.constant 0 : index
    %1 = vector.load %arg2[%c0_1, %c0_2] : memref<32x16xf32, #tpu.memory_space<vmem>>, vector<32x16xf32>
    %cst = arith.constant dense<0.000000e+00> : vector<8x16xf32>
    %2 = tpu.matmul %0, %1, %cst {dimension_numbers = #tpu.dot_dimension_numbers<[1], [0], [0], [1], [0, 0, 1, 1], [], []>} : vector<8x32xf32>, vector<32x16xf32>, vector<8x16xf32> -> vector<8x16xf32>
    %c0_3 = arith.constant 0 : index
    %c0_4 = arith.constant 0 : index
    %3 = vector.load %arg3[%c0_3, %c0_4] : memref<1x16xf32, #tpu.memory_space<vmem>>, vector<1x16xf32>
    %4 = vector.broadcast %3 : vector<1x16xf32> to vector<8x16xf32>
    %5 = arith.addf %2, %4 : vector<8x16xf32>
    %cst_5 = arith.constant dense<0xFF800000> : vector<8xf32>
    %6 = vector.multi_reduction <maximumf>, %5, %cst_5 [1] : vector<8x16xf32> to vector<8xf32>
    %7 = vector.shape_cast %6 : vector<8xf32> to vector<8x1xf32>
    %8 = vector.broadcast %7 : vector<8x1xf32> to vector<8x16xf32>
    %9 = arith.subf %5, %8 : vector<8x16xf32>
    %10 = math.exp %9 : vector<8x16xf32>
    %cst_6 = arith.constant dense<0.000000e+00> : vector<8xf32>
    %11 = vector.multi_reduction <add>, %10, %cst_6 [1] : vector<8x16xf32> to vector<8xf32>
    %12 = vector.shape_cast %11 : vector<8xf32> to vector<8x1xf32>
    %13 = math.log %12 : vector<8x1xf32>
    %14 = arith.addf %13, %7 : vector<8x1xf32>
    %15 = vector.broadcast %14 : vector<8x1xf32> to vector<8x16xf32>
    %16 = arith.subf %5, %15 : vector<8x16xf32>
    %c0_7 = arith.constant 0 : index
    %c0_8 = arith.constant 0 : index
    %17 = vector.load %arg4[%c0_7, %c0_8] : memref<8x16xf32, #tpu.memory_space<vmem>>, vector<8x16xf32>
    tpu.vector_store %arg4[%c0_7, %c0_8], %16 {strides = array<i32>} : memref<8x16xf32, #tpu.memory_space<vmem>>, vector<8x16xf32>,
    %18 = tpu.reciprocal %12 : vector<8x1xf32> -> vector<8x1xf32>
    %19 = vector.broadcast %18 : vector<8x1xf32> to vector<8x16xf32>
    %20 = arith.mulf %10, %19 : vector<8x16xf32>
    %c0_9 = arith.constant 0 : index
    %c0_10 = arith.constant 0 : index
    %21 = vector.load %arg5[%c0_9, %c0_10] : memref<8x16xf32, #tpu.memory_space<vmem>>, vector<8x16xf32>
    tpu.vector_store %arg5[%c0_9, %c0_10], %20 {strides = array<i32>} : memref<8x16xf32, #tpu.memory_space<vmem>>, vector<8x16xf32>,
    return
  }
  func.func @transform_0(%arg0: i32) -> (i32, i32) {
    %c0_i32 = arith.constant 0 : i32
    %c0_i32_0 = arith.constant 0 : i32
    return %arg0, %c0_i32 : i32, i32
  }
  func.func @transform_1(%arg0: i32) -> (i32, i32) {
    %c0_i32 = arith.constant 0 : i32
    %c0_i32_0 = arith.constant 0 : i32
    %c0_i32_1 = arith.constant 0 : i32
    return %c0_i32, %c0_i32_0 : i32, i32
  }
  func.func @transform_2(%arg0: i32) -> (i32, i32) {
    %c0_i32 = arith.constant 0 : i32
    %c0_i32_0 = arith.constant 0 : i32
    %c0_i32_1 = arith.constant 0 : i32
    return %c0_i32, %c0_i32_0 : i32, i32
  }
  func.func @transform_3(%arg0: i32) -> (i32, i32) {
    %c0_i32 = arith.constant 0 : i32
    %c0_i32_0 = arith.constant 0 : i32
    return %arg0, %c0_i32 : i32, i32
  }
  func.func @transform_4(%arg0: i32) -> (i32, i32) {
    %c0_i32 = arith.constant 0 : i32
    %c0_i32_0 = arith.constant 0 : i32
    return %arg0, %c0_i32 : i32, i32
  }
}

</mosaic_0001>

<llo_original>
// kernel: categorical_forward.1
$region0: #{categorical_forward.1}
  #allocation0 [shape = 'u32[]', space=smem, size = 0x4, offset = 0x4, fixed_abs, tag = 'smem constant byte address 0x4 - core index']
  #allocation1 [shape = 'u32[72,128]{1,0:T(1,128)}', space=vmem, size = 0x9000, scoped, tag = 'internal scratch']
  %s0 = inlined_call_operand.vmem [shape: f32[8,32], index: 0, kind: input, shape index: {}]
  %s1 = inlined_call_operand.vmem [shape: f32[32,16], index: 1, kind: input, shape index: {}]
  %s2 = inlined_call_operand.vmem [shape: f32[1,16], index: 2, kind: input, shape index: {}]
  %s3 = inlined_call_operand.hbm [shape: f32[8,16], index: 3, kind: output, shape index: {0}]
  %s4 = inlined_call_operand.hbm [shape: f32[8,16], index: 4, kind: output, shape index: {1}]
  %5 = xla_tuple %s3, %s4
  %s6 = sld [smem:[#allocation0]]
  $region30: #{categorical_forward.1} parent=0
    _
  %s8 = ssub.s32 1, %s6
  %s9 = scalar_select 0, %s8, %s6
  $region1: #{categorical_forward.1} parent=0
    #allocation2 [shape = 'u8[4096]{0}', space=vmem, size = 0x1000, scoped, tag = 'output window, operand 0, single buffered']
    #allocation3 [shape = 's32[1]{0}', space=sflag, size = 0x4, scoped, tag = 'scoped memory for categorical_forward.1']
    #allocation4 [shape = 'u8[4096]{0}', space=vmem, size = 0x1000, scoped, tag = 'output window, operand 1, single buffered']
    #allocation5 [shape = 's32[1]{0}', space=sflag, size = 0x4, scoped, tag = 'scoped memory for categorical_forward.1']
    %10 = vsyncpa [#allocation3], 0
    %11 = vsyncpa [#allocation5], 0
    // Predicated region
    $region2: #{categorical_forward.1} parent=1 // pred_check
      _
    $region3: #{categorical_forward.1} parent=1 // pred_check_branch
      %13 = sbr.rel (0) target = $region5
    $region4: #{categorical_forward.1} parent=1 // pred_region
      _
    $region5: #{categorical_forward.1} parent=1 // pred_fallthru
      _
    // Predicated region
    $region6: #{categorical_forward.1} parent=1 // pred_check
      _
    $region7: #{categorical_forward.1} parent=1 // pred_check_branch
      %15 = sbr.rel (0) target = $region9
    $region8: #{categorical_forward.1} parent=1 // pred_region
      _
    $region9: #{categorical_forward.1} parent=1 // pred_fallthru
      _
    // Predicated region
    $region10: #{categorical_forward.1} parent=1 // pred_check
      _
    $region11: #{categorical_forward.1} parent=1 // pred_check_branch
      %17 = sbr.rel (0) target = $region13
    $region12: #{categorical_forward.1} parent=1 // pred_region
      _
    $region13: #{categorical_forward.1} parent=1 // pred_fallthru
      _
    %v18 = vld [vmem:[%s0] sm:$0xff]
    %v19 = vld [vmem:[%s1] sm:$0xff]
    %v20 = vld [vmem:[%s1 + $0x8] sm:$0xff]
    %v21 = vld [vmem:[%s1 + $0x10] sm:$0xff]
    %v22 = vld [vmem:[%s1 + $0x18] sm:$0xff]
    %v23 = vld [vmem:[%s2] sm:$0x1]
    %v25 = vperm.slane %v23, 0
    %vm27 = vcmask 261120
    %v29 = vsel %vm27, %v18, 0
    %31 = vmatpush.msra.mxu0 0.0
    %32 = vmatpush.msra.mxu0 0.0
    %33 = vmatpush.msra.mxu0 0.0
    %34 = vmatpush.msra.mxu0 0.0
    %35 = vmatpush.msra.mxu0 0.0
    %36 = vmatpush.msra.mxu0 0.0
    %37 = vmatpush.msra.mxu0 0.0
    %38 = vmatpush.msra.mxu0 0.0
    %39 = vmatpush.msra.mxu0 0.0
    %40 = vmatpush.msra.mxu0 0.0
    %41 = vmatpush.msra.mxu0 0.0
    %42 = vmatpush.msra.mxu0 0.0
    %43 = vmatpush.msra.mxu0 %v22
    %44 = vmatpush.msra.mxu0 %v21
    %45 = vmatpush.msra.mxu0 %v20
    %46 = vmatpush.msra.mxu0 %v19
    %47 = vmatmul.f32.gmra.mxu0 %v29
    %v48 = vpop.f32.mrf.mxu0
    %v49 = vadd.f32 %v25, %v48
    %50 = vdwg.mxu0
    %vm51 = vcmask 130048
    %v52 = vsel %vm51, %v49, -inf
    %53 = vmax.xlane.f32.xlu0 %v52
    %v54 = vpop.xlane.xlu0 %53
    %v55 = vsub.f32 %v49, %v54
    %v56 = vmul.f32 %v55, 1.442695
    %v57 = vpow.pop %v56
    %v58 = vsel %vm51, %v57, 0.0
    %59 = vadd.xlane.f32.xlu0 %v58
    %v60 = vpop.xlane.xlu0 %59
    %v61 = vlog2.pop %v60
    %v62 = vmul.f32 %v61, 0.6931472
    %v63 = vadd.f32 %v62, %v54
    %v64 = vsub.f32 %v49, %v63
    %65 = vst.msk [vmem:[#allocation2] sm:$0xff] %vm51, %v64
    %v66 = vrcp.pop %v60
    %v67 = vmul.f32 %v60, %v66
    %v68 = vsub.f32 1.0, %v67
    %v69 = vmul.f32 %v66, %v68
    %v70 = vadd.f32 %v66, %v69
    %vm71 = vweird.f32 %v60
    %vm72 = vweird.f32 %v66
    %vm73 = vmor %vm71, %vm72
    %v74 = vsel %vm73, %v66, %v70
    %v75 = vand.u32 2147483647, %v60
    %vm76 = vcmp.eq.f32.partialorder %v75, 8.507059e+37
    %v77 = vand.u32 %v60, 2147483648
    %v78 = vor.u32 1.1754944e-38, %v77
    %v79 = vsel %vm76, %v78, %v74
    %v80 = vmul.f32 %v57, %v79
    %81 = vst.msk [vmem:[#allocation4] sm:$0xff] %vm51, %v80
    // Predicated region
    $region14: #{categorical_forward.1} parent=1 // pred_check
      _
    $region15: #{categorical_forward.1} parent=1 // pred_check_branch
      %83 = sbr.rel (0) target = $region17
    $region16: #{categorical_forward.1} parent=1 // pred_region
      %85 = vsyncadd [#allocation3], 0
      %s87 = sshll.u32 [#allocation2], 4
      %s88 = int_to_ptr.vmem [resolvable:$true] %s87
      %s89 = sshll.u32 %s3, 4
      %s90 = int_to_ptr.hbm [resolvable:$true] %s89
      %92 = dma.vmem_to_hbm [thread:$0]  %s88, 128, %s90, [#allocation3]
    $region17: #{categorical_forward.1} parent=1 // pred_fallthru
      _
    // Predicated region
    $region18: #{categorical_forward.1} parent=1 // pred_check
      _
    $region19: #{categorical_forward.1} parent=1 // pred_check_branch
      %94 = sbr.rel (0) target = $region21
    $region20: #{categorical_forward.1} parent=1 // pred_region
      %96 = vsyncadd [#allocation5], 0
      %s98 = sshll.u32 [#allocation4], 4
      %s99 = int_to_ptr.vmem [resolvable:$true] %s98
      %s100 = sshll.u32 %s4, 4
      %s101 = int_to_ptr.hbm [resolvable:$true] %s100
      %103 = dma.vmem_to_hbm [thread:$0]  %s99, 128, %s101, [#allocation5]
    $region21: #{categorical_forward.1} parent=1 // pred_fallthru
      _
    // Predicated region
    $region22: #{categorical_forward.1} parent=1 // pred_check
      _
    $region23: #{categorical_forward.1} parent=1 // pred_check_branch
      %105 = sbr.rel (0) target = $region25
    $region24: #{categorical_forward.1} parent=1 // pred_region
      %107 = dma.done [#allocation3], 128
    $region25: #{categorical_forward.1} parent=1 // pred_fallthru
      _
    // Predicated region
    $region26: #{categorical_forward.1} parent=1 // pred_check
      _
    $region27: #{categorical_forward.1} parent=1 // pred_check_branch
      %109 = sbr.rel (0) target = $region29
    $region28: #{categorical_forward.1} parent=1 // pred_region
      %111 = dma.done [#allocation5], 128
    $region29: #{categorical_forward.1} parent=1 // pred_fallthru
      _
    %112 = vsyncpa [#allocation3], 1
    %113 = vsyncpa [#allocation5], 1

</llo_original>
